<compile_context>
chip_gen: v7x
topology: tpu7x:2x2x1
jax: 0.10.0
libtpu: 0.0.40
codegen_flags: <defaults>
</compile_context>

<pallas_src>
import math

import numpy as np
import jax
import jax.numpy as jnp
from jax.experimental import pallas as pl
from jax.experimental.pallas import tpu as pltpu


# ----------------------------- theta init (module defaults) -----------------------------
def exp_theta(dim, min_period=0.01, max_period=1000.0):
    """get_exp_period from the PyTorch module (init='exp', the default)."""
    i = np.arange(0, dim, 2)[: dim // 2].astype(np.float64)
    max_theta = 2.0 * math.pi / min_period
    min_theta = 2.0 * math.pi / max_period
    alpha = math.log(max_theta / min_theta) / (dim - 2)
    thetas = max_theta * np.exp(-alpha * i)
    return jnp.asarray(thetas, dtype=jnp.float32)


# ----------------------------------- Pallas kernel --------------------------------------
def _rope_kernel(cos_ref, sn_ref, sp_ref,
                 q_ref, k_ref, v_ref,
                 qo_ref, ko_ref, vo_ref):
    rows, W = q_ref.shape
    # hoist the sublane broadcasts (JAX does not CSE broadcast_in_dim)
    cos = jnp.broadcast_to(cos_ref[...], (rows, W))   # [rows, W] f32
    sn = jnp.broadcast_to(sn_ref[...], (rows, W))     # -sin on even lanes, 0 on odd
    sp = jnp.broadcast_to(sp_ref[...], (rows, W))     # +sin on odd lanes, 0 on even

    def rotate(x_ref, o_ref):
        x = x_ref[...].astype(jnp.float32)            # [rows, W]
        x_next = pltpu.roll(x, W - 1, 1)              # x_next[f] = x[(f+1) % W]  (XLU)
        x_prev = pltpu.roll(x, 1, 1)                  # x_prev[f] = x[(f-1) % W]  (XLU)
        o_ref[...] = (x * cos + x_next * sn + x_prev * sp).astype(o_ref.dtype)

    rotate(q_ref, qo_ref)
    rotate(k_ref, ko_ref)
    rotate(v_ref, vo_ref)


# -------------------------------------- tiling -------------------------------------------
def _cdiv(a, b):
    return -(-a // b)


def _choose_tiles(B, LD, itemsize, per_stream_budget=1 << 20):
    """Pick a (row_tile, lane_tile) block for the [B, L*D] layout.

    Lane tiles are multiples of 128 (lane-dense, unmasked stores); row tiles are
    multiples of 8 sublanes (or the full B when B < 8).  Tiles need not divide the
    array: ragged edges are handled by Pallas boundary masking and the zero-masked
    roll wrap.  Real VMEM footprint ~ 2 (double-buffer) * 6 streams * tile + tables,
    so a 1 MiB per-stream budget keeps the total well under 16 MiB.
    """
    if LD < 128:
        lane_cands = [LD]
    else:
        ld_pad = _cdiv(LD, 128) * 128
        lane_cands = [128 << k for k in range(10) if (128 << k) <= ld_pad] or [128]
    if B < 8:
        row_cands = [B]
    else:
        row_cands = [8 << k for k in range(8) if (8 << k) <= B] or [8]

    pairs = [(r, c) for r in row_cands for c in lane_cands]
    tile_bytes = lambda rc: rc[0] * rc[1] * itemsize
    steps = lambda rc: _cdiv(B, rc[0]) * _cdiv(LD, rc[1])

    in_budget = [p for p in pairs if tile_bytes(p) <= per_stream_budget]
    if not in_budget:
        in_budget = [min(pairs, key=tile_bytes)]
    best_bytes = max(tile_bytes(p) for p in in_budget)

    # Prefer >= 2 grid steps (both v7x TensorCores get work) as long as the tile
    # stays large enough to remain bandwidth-efficient.
    floor = min(best_bytes, 512 << 10)
    multi = [p for p in in_budget if steps(p) >= 2 and tile_bytes(p) >= floor]
    pool = multi if multi else in_budget
    return max(pool, key=lambda p: (tile_bytes(p), p[1]))


# -------------------------------------- wrapper ------------------------------------------
def rotary_embedding(xq, xk, xv, theta):
    """xq, xk, xv: [B, L, D]; theta: [D//2]. Returns rotated (xq, xk, xv), dtype preserved."""
    B, L, D = xq.shape
    assert xk.shape == (B, L, D) and xv.shape == (B, L, D)
    assert D % 2 == 0
    LD = L * D

    # --- cos / sign-folded sin tables at natural size [1, L*D] (no replication) ---
    t = jnp.arange(L, dtype=jnp.float32)
    freqs = jnp.outer(t, theta.astype(jnp.float32))               # [L, D//2]
    cos_t = jnp.repeat(jnp.cos(freqs), 2, axis=1).reshape(1, LD)  # f32
    sin2 = jnp.repeat(jnp.sin(freqs), 2, axis=1).reshape(1, LD)
    even = (jnp.arange(LD) % 2 == 0)[None, :]
    sin_next = jnp.where(even, -sin2, 0.0)   # multiplies x[f+1]; 0 on odd lanes masks wrap
    sin_prev = jnp.where(even, 0.0, sin2)    # multiplies x[f-1]; 0 on even lanes masks wrap

    # --- lane-dense flattening: last dim L*D (multiple of 128 for realistic shapes) ---
    q2 = xq.reshape(B, LD)
    k2 = xk.reshape(B, LD)
    v2 = xv.reshape(B, LD)

    itemsize = jnp.dtype(xq.dtype).itemsize
    tile_b, tile_ld = _choose_tiles(B, LD, itemsize)
    grid = (_cdiv(B, tile_b), _cdiv(LD, tile_ld))

    row_spec = pl.BlockSpec((tile_b, tile_ld), lambda i, j: (i, j))
    tab_spec = pl.BlockSpec((1, tile_ld), lambda i, j: (0, j))    # follows the lane axis only

    # real footprint: double-buffered 3 inputs + 3 outputs + 3 f32 tables
    tile_bytes = tile_b * tile_ld * itemsize
    footprint = 2 * 6 * tile_bytes + 2 * 3 * tile_ld * 4
    vmem_limit = int(max(32 << 20, 2 * footprint))                # > v5e 16 MiB default, < v7x 64 MiB

    cost = pl.CostEstimate(
        flops=3 * B * LD * 5,                                     # 3 muls + 2 adds per element
        transcendentals=0,
        bytes_accessed=3 * B * LD * itemsize * 2 + 3 * LD * 4,    # q/k/v rd+wr, tables once
    )

    out_shape = tuple(jax.ShapeDtypeStruct((B, LD), a.dtype) for a in (xq, xk, xv))

    qo, ko, vo = pl.pallas_call(
        _rope_kernel,
        out_shape=out_shape,
        grid=grid,
        in_specs=[tab_spec, tab_spec, tab_spec, row_spec, row_spec, row_spec],
        out_specs=(row_spec, row_spec, row_spec),
        compiler_params=pltpu.CompilerParams(
            dimension_semantics=("parallel", "parallel"),
            vmem_limit_bytes=vmem_limit,
        ),
        cost_estimate=cost,
    )(cos_t, sin_next, sin_prev, q2, k2, v2)

    return (qo.reshape(B, L, D), ko.reshape(B, L, D), vo.reshape(B, L, D))


# ----------------------------------- pure-JAX reference -----------------------------------
def _rope_reference(x, theta):
    B, L, D = x.shape
    t = jnp.arange(L, dtype=jnp.float32)
    freqs = jnp.outer(t, theta.astype(jnp.float32))               # [L, D//2]
    c, s = jnp.cos(freqs), jnp.sin(freqs)
    xr = x.astype(jnp.float32).reshape(B, L, D // 2, 2)
    a, b = xr[..., 0], xr[..., 1]
    out = jnp.stack([a * c - b * s, a * s + b * c], axis=-1).reshape(B, L, D)
    return out.astype(x.dtype)


if __name__ == "__main__":
    B, L, DIM = 2, 8, 32                       # small shapes consistent with the module
    key = jax.random.PRNGKey(0)
    kq, kk, kv = jax.random.split(key, 3)
    xq = jax.random.normal(kq, (B, L, DIM), jnp.float32)
    xk = jax.random.normal(kk, (B, L, DIM), jnp.float32)
    xv = jax.random.normal(kv, (B, L, DIM), jnp.float32)

    theta = exp_theta(DIM, min_period=0.01, max_period=1000.0)    # module defaults (init='exp')

    qo, ko, vo = rotary_embedding(xq, xk, xv, theta)
    jax.block_until_ready((qo, ko, vo))

    # correctness check — the roll-based path is exact f32 elementwise math, so the
    # tolerance can be tight.
    for got, x in ((qo, xq), (ko, xk), (vo, xv)):
        ref = _rope_reference(x, theta)
        assert got.shape == x.shape and got.dtype == x.dtype
        err = float(jnp.max(jnp.abs(got.astype(jnp.float32) - ref.astype(jnp.float32))))
        assert err < 1e-4, f"max abs error {err}"

    print("KERNEL_OK")
</pallas_src>

<mosaic_0001>
module attributes {stable_mosaic.version = 11 : i64} {
  func.func @_rope_kernel(%arg0: i32, %arg1: i32, %arg2: memref<1x256xf32, #tpu.memory_space<vmem>>, %arg3: memref<1x256xf32, #tpu.memory_space<vmem>>, %arg4: memref<1x256xf32, #tpu.memory_space<vmem>>, %arg5: memref<2x256xf32, #tpu.memory_space<vmem>>, %arg6: memref<2x256xf32, #tpu.memory_space<vmem>>, %arg7: memref<2x256xf32, #tpu.memory_space<vmem>>, %arg8: memref<2x256xf32, #tpu.memory_space<vmem>>, %arg9: memref<2x256xf32, #tpu.memory_space<vmem>>, %arg10: memref<2x256xf32, #tpu.memory_space<vmem>>) attributes {dimension_semantics = [#tpu.dimension_semantics<parallel>, #tpu.dimension_semantics<parallel>], iteration_bounds = array<i64: 1, 1>, scalar_prefetch = 0 : i64, scratch_operands = 0 : i64, tpu.core_type = #tpu.core_type<tc>, window_params = [{transform_indices = @transform_0, window_bounds = array<i64: 1, 256>}, {transform_indices = @transform_1, window_bounds = array<i64: 1, 256>}, {transform_indices = @transform_2, window_bounds = array<i64: 1, 256>}, {transform_indices = @transform_3, window_bounds = array<i64: 2, 256>}, {transform_indices = @transform_4, window_bounds = array<i64: 2, 256>}, {transform_indices = @transform_5, window_bounds = array<i64: 2, 256>}, {transform_indices = @transform_6, window_bounds = array<i64: 2, 256>}, {transform_indices = @transform_7, window_bounds = array<i64: 2, 256>}, {transform_indices = @transform_8, window_bounds = array<i64: 2, 256>}]} {
    %c0 = arith.constant 0 : index
    %c0_0 = arith.constant 0 : index
    %0 = vector.load %arg2[%c0, %c0_0] : memref<1x256xf32, #tpu.memory_space<vmem>>, vector<1x256xf32>
    %1 = vector.shape_cast %0 : vector<1x256xf32> to vector<1x256xf32>
    %2 = vector.broadcast %1 : vector<1x256xf32> to vector<2x256xf32>
    %c0_1 = arith.constant 0 : index
    %c0_2 = arith.constant 0 : index
    %3 = vector.load %arg3[%c0_1, %c0_2] : memref<1x256xf32, #tpu.memory_space<vmem>>, vector<1x256xf32>
    %4 = vector.shape_cast %3 : vector<1x256xf32> to vector<1x256xf32>
    %5 = vector.broadcast %4 : vector<1x256xf32> to vector<2x256xf32>
    %c0_3 = arith.constant 0 : index
    %c0_4 = arith.constant 0 : index
    %6 = vector.load %arg4[%c0_3, %c0_4] : memref<1x256xf32, #tpu.memory_space<vmem>>, vector<1x256xf32>
    %7 = vector.shape_cast %6 : vector<1x256xf32> to vector<1x256xf32>
    %8 = vector.broadcast %7 : vector<1x256xf32> to vector<2x256xf32>
    %c0_5 = arith.constant 0 : index
    %c0_6 = arith.constant 0 : index
    %9 = vector.load %arg5[%c0_5, %c0_6] : memref<2x256xf32, #tpu.memory_space<vmem>>, vector<2x256xf32>
    %c255_i32 = arith.constant 255 : i32
    %10 = tpu.dynamic_rotate %9 by %c255_i32 dim 1 : vector<2x256xf32>, i32 -> vector<2x256xf32>
    %c1_i32 = arith.constant 1 : i32
    %11 = tpu.dynamic_rotate %9 by %c1_i32 dim 1 : vector<2x256xf32>, i32 -> vector<2x256xf32>
    %12 = arith.mulf %9, %2 : vector<2x256xf32>
    %13 = arith.mulf %10, %5 : vector<2x256xf32>
    %14 = arith.addf %12, %13 : vector<2x256xf32>
    %15 = arith.mulf %11, %8 : vector<2x256xf32>
    %16 = arith.addf %14, %15 : vector<2x256xf32>
    %c0_7 = arith.constant 0 : index
    %c0_8 = arith.constant 0 : index
    %17 = vector.load %arg8[%c0_7, %c0_8] : memref<2x256xf32, #tpu.memory_space<vmem>>, vector<2x256xf32>
    tpu.vector_store %arg8[%c0_7, %c0_8], %16 {strides = array<i32>} : memref<2x256xf32, #tpu.memory_space<vmem>>, vector<2x256xf32>,
    %c0_9 = arith.constant 0 : index
    %c0_10 = arith.constant 0 : index
    %18 = vector.load %arg6[%c0_9, %c0_10] : memref<2x256xf32, #tpu.memory_space<vmem>>, vector<2x256xf32>
    %c255_i32_11 = arith.constant 255 : i32
    %19 = tpu.dynamic_rotate %18 by %c255_i32_11 dim 1 : vector<2x256xf32>, i32 -> vector<2x256xf32>
    %c1_i32_12 = arith.constant 1 : i32
    %20 = tpu.dynamic_rotate %18 by %c1_i32_12 dim 1 : vector<2x256xf32>, i32 -> vector<2x256xf32>
    %21 = arith.mulf %18, %2 : vector<2x256xf32>
    %22 = arith.mulf %19, %5 : vector<2x256xf32>
    %23 = arith.addf %21, %22 : vector<2x256xf32>
    %24 = arith.mulf %20, %8 : vector<2x256xf32>
    %25 = arith.addf %23, %24 : vector<2x256xf32>
    %c0_13 = arith.constant 0 : index
    %c0_14 = arith.constant 0 : index
    %26 = vector.load %arg9[%c0_13, %c0_14] : memref<2x256xf32, #tpu.memory_space<vmem>>, vector<2x256xf32>
    tpu.vector_store %arg9[%c0_13, %c0_14], %25 {strides = array<i32>} : memref<2x256xf32, #tpu.memory_space<vmem>>, vector<2x256xf32>,
    %c0_15 = arith.constant 0 : index
    %c0_16 = arith.constant 0 : index
    %27 = vector.load %arg7[%c0_15, %c0_16] : memref<2x256xf32, #tpu.memory_space<vmem>>, vector<2x256xf32>
    %c255_i32_17 = arith.constant 255 : i32
    %28 = tpu.dynamic_rotate %27 by %c255_i32_17 dim 1 : vector<2x256xf32>, i32 -> vector<2x256xf32>
    %c1_i32_18 = arith.constant 1 : i32
    %29 = tpu.dynamic_rotate %27 by %c1_i32_18 dim 1 : vector<2x256xf32>, i32 -> vector<2x256xf32>
    %30 = arith.mulf %27, %2 : vector<2x256xf32>
    %31 = arith.mulf %28, %5 : vector<2x256xf32>
    %32 = arith.addf %30, %31 : vector<2x256xf32>
    %33 = arith.mulf %29, %8 : vector<2x256xf32>
    %34 = arith.addf %32, %33 : vector<2x256xf32>
    %c0_19 = arith.constant 0 : index
    %c0_20 = arith.constant 0 : index
    %35 = vector.load %arg10[%c0_19, %c0_20] : memref<2x256xf32, #tpu.memory_space<vmem>>, vector<2x256xf32>
    tpu.vector_store %arg10[%c0_19, %c0_20], %34 {strides = array<i32>} : memref<2x256xf32, #tpu.memory_space<vmem>>, vector<2x256xf32>,
    return
  }
  func.func @transform_0(%arg0: i32, %arg1: i32) -> (i32, i32) {
    %c0_i32 = arith.constant 0 : i32
    %c0_i32_0 = arith.constant 0 : i32
    return %c0_i32, %arg1 : i32, i32
  }
  func.func @transform_1(%arg0: i32, %arg1: i32) -> (i32, i32) {
    %c0_i32 = arith.constant 0 : i32
    %c0_i32_0 = arith.constant 0 : i32
    return %c0_i32, %arg1 : i32, i32
  }
  func.func @transform_2(%arg0: i32, %arg1: i32) -> (i32, i32) {
    %c0_i32 = arith.constant 0 : i32
    %c0_i32_0 = arith.constant 0 : i32
    return %c0_i32, %arg1 : i32, i32
  }
  func.func @transform_3(%arg0: i32, %arg1: i32) -> (i32, i32) {
    %c0_i32 = arith.constant 0 : i32
    return %arg0, %arg1 : i32, i32
  }
  func.func @transform_4(%arg0: i32, %arg1: i32) -> (i32, i32) {
    %c0_i32 = arith.constant 0 : i32
    return %arg0, %arg1 : i32, i32
  }
  func.func @transform_5(%arg0: i32, %arg1: i32) -> (i32, i32) {
    %c0_i32 = arith.constant 0 : i32
    return %arg0, %arg1 : i32, i32
  }
  func.func @transform_6(%arg0: i32, %arg1: i32) -> (i32, i32) {
    %c0_i32 = arith.constant 0 : i32
    return %arg0, %arg1 : i32, i32
  }
  func.func @transform_7(%arg0: i32, %arg1: i32) -> (i32, i32) {
    %c0_i32 = arith.constant 0 : i32
    return %arg0, %arg1 : i32, i32
  }
  func.func @transform_8(%arg0: i32, %arg1: i32) -> (i32, i32) {
    %c0_i32 = arith.constant 0 : i32
    return %arg0, %arg1 : i32, i32
  }
}

</mosaic_0001>

<llo_original>
// kernel: tpu_custom_call.1
$region0: #{tpu_custom_call.1}
  #allocation0 [shape = 'u32[]', space=smem, size = 0x4, offset = 0x4, fixed_abs, tag = 'smem constant byte address 0x4 - core index']
  #allocation1 [shape = 'u32[144,128]{1,0:T(1,128)}', space=vmem, size = 0x12000, scoped, tag = 'internal scratch']
  %s0 = inlined_call_operand.hbm [shape: f32[1,256], index: 0, kind: input, shape index: {}]
  %s1 = inlined_call_operand.vmem [shape: f32[1,256], index: 1, kind: input, shape index: {}]
  %s2 = inlined_call_operand.hbm [shape: f32[1,256], index: 2, kind: input, shape index: {}]
  %s3 = inlined_call_operand.vmem [shape: f32[2,256], index: 3, kind: input, shape index: {}]
  %s4 = inlined_call_operand.vmem [shape: f32[2,256], index: 4, kind: input, shape index: {}]
  %s5 = inlined_call_operand.vmem [shape: f32[2,256], index: 5, kind: input, shape index: {}]
  %s6 = inlined_call_operand.hbm [shape: f32[2,256], index: 6, kind: output, shape index: {0}]
  %s7 = inlined_call_operand.hbm [shape: f32[2,256], index: 7, kind: output, shape index: {1}]
  %s8 = inlined_call_operand.hbm [shape: f32[2,256], index: 8, kind: output, shape index: {2}]
  %9 = xla_tuple %s6, %s7, %s8
  %s10 = sld [smem:[#allocation0]]
  $region58: #{tpu_custom_call.1} parent=0
    _
  %s12 = ssub.s32 1, %s10
  %s13 = scalar_select 0, %s12, %s10
  $region1: #{tpu_custom_call.1} parent=0
    #allocation2 [shape = 'u8[1024]{0}', space=vmem, size = 0x400, scoped, tag = 'input window, operand 0, single buffered']
    #allocation3 [shape = 's32[1]{0}', space=sflag, size = 0x4, scoped, tag = 'scoped memory for tpu_custom_call.1']
    #allocation4 [shape = 's32[1]{0}', space=sflag, size = 0x4, scoped, tag = 'scoped memory for tpu_custom_call.1']
    #allocation5 [shape = 'u8[1024]{0}', space=vmem, size = 0x400, scoped, tag = 'input window, operand 2, single buffered']
    #allocation6 [shape = 's32[1]{0}', space=sflag, size = 0x4, scoped, tag = 'scoped memory for tpu_custom_call.1']
    #allocation7 [shape = 'u8[2048]{0}', space=vmem, size = 0x800, scoped, tag = 'output window, operand 0, single buffered']
    #allocation8 [shape = 'u8[2048]{0}', space=vmem, size = 0x800, scoped, tag = 'output window, operand 1, single buffered']
    #allocation9 [shape = 's32[1]{0}', space=sflag, size = 0x4, scoped, tag = 'scoped memory for tpu_custom_call.1']
    #allocation10 [shape = 'u8[2048]{0}', space=vmem, size = 0x800, scoped, tag = 'output window, operand 2, single buffered']
    %14 = vsyncpa [#allocation3], 0
    %15 = vsyncpa [#allocation6], 0
    %16 = vsyncpa [#allocation4], 0
    %17 = vsyncpa [#allocation9], 0
    // Predicated region
    $region2: #{tpu_custom_call.1} parent=1 // pred_check
      _
    $region3: #{tpu_custom_call.1} parent=1 // pred_check_branch
      %19 = sbr.rel (0) target = $region5
    $region4: #{tpu_custom_call.1} parent=1 // pred_region
      %s21 = ssub.s32 32, 32
      %22 = vsyncadd [#allocation3], %s21
      %s24 = sshll.u32 [#allocation2], 4
      %s25 = int_to_ptr.vmem [resolvable:$true] %s24
      %27 = dma.hbm_to_vmem [thread:$0]  %s0, 32, %s25, [#allocation3]
    $region5: #{tpu_custom_call.1} parent=1 // pred_fallthru
      _
    // Predicated region
    $region6: #{tpu_custom_call.1} parent=1 // pred_check
      _
    $region7: #{tpu_custom_call.1} parent=1 // pred_check_branch
      %29 = sbr.rel (0) target = $region9
    $region8: #{tpu_custom_call.1} parent=1 // pred_region
      _
    $region9: #{tpu_custom_call.1} parent=1 // pred_fallthru
      _
    // Predicated region
    $region10: #{tpu_custom_call.1} parent=1 // pred_check
      _
    $region11: #{tpu_custom_call.1} parent=1 // pred_check_branch
      %31 = sbr.rel (0) target = $region13
    $region12: #{tpu_custom_call.1} parent=1 // pred_region
      %s33 = ssub.s32 32, 32
      %34 = vsyncadd [#allocation6], %s33
      %s36 = sshll.u32 [#allocation5], 4
      %s37 = int_to_ptr.vmem [resolvable:$true] %s36
      %39 = dma.hbm_to_vmem [thread:$0]  %s2, 32, %s37, [#allocation6]
    $region13: #{tpu_custom_call.1} parent=1 // pred_fallthru
      _
    // Predicated region
    $region14: #{tpu_custom_call.1} parent=1 // pred_check
      _
    $region15: #{tpu_custom_call.1} parent=1 // pred_check_branch
      %41 = sbr.rel (0) target = $region17
    $region16: #{tpu_custom_call.1} parent=1 // pred_region
      _
    $region17: #{tpu_custom_call.1} parent=1 // pred_fallthru
      _
    // Predicated region
    $region18: #{tpu_custom_call.1} parent=1 // pred_check
      _
    $region19: #{tpu_custom_call.1} parent=1 // pred_check_branch
      %43 = sbr.rel (0) target = $region21
    $region20: #{tpu_custom_call.1} parent=1 // pred_region
      _
    $region21: #{tpu_custom_call.1} parent=1 // pred_fallthru
      _
    // Predicated region
    $region22: #{tpu_custom_call.1} parent=1 // pred_check
      _
    $region23: #{tpu_custom_call.1} parent=1 // pred_check_branch
      %45 = sbr.rel (0) target = $region25
    $region24: #{tpu_custom_call.1} parent=1 // pred_region
      _
    $region25: #{tpu_custom_call.1} parent=1 // pred_fallthru
      _
    // Predicated region
    $region26: #{tpu_custom_call.1} parent=1 // pred_check
      _
    $region27: #{tpu_custom_call.1} parent=1 // pred_check_branch
      %47 = sbr.rel (0) target = $region29
    $region28: #{tpu_custom_call.1} parent=1 // pred_region
      %48 = dma.done [#allocation3], 32
    $region29: #{tpu_custom_call.1} parent=1 // pred_fallthru
      _
    // Predicated region
    $region30: #{tpu_custom_call.1} parent=1 // pred_check
      _
    $region31: #{tpu_custom_call.1} parent=1 // pred_check_branch
      %50 = sbr.rel (0) target = $region33
    $region32: #{tpu_custom_call.1} parent=1 // pred_region
      %51 = dma.done [#allocation6], 32
    $region33: #{tpu_custom_call.1} parent=1 // pred_fallthru
      _
    %v52 = vld [vmem:[#allocation2] sm:$0x3]
    %v54 = vlaneseq
    %v55 = vshrl.u32 %v54, 7
    %v56 = vsub.s32 0, %v55
    %v57 = vrot.slane %v52, %v56
    %v58 = vlaneseq
    %v59 = vshrl.u32 %v58, 7
    %v60 = vsub.s32 1, %v59
    %v61 = vrot.slane %v52, %v60
    %v62 = vld [vmem:[%s1] sm:$0x3]
    %v64 = vlaneseq
    %v65 = vshrl.u32 %v64, 7
    %v66 = vsub.s32 0, %v65
    %v67 = vrot.slane %v62, %v66
    %v68 = vlaneseq
    %v69 = vshrl.u32 %v68, 7
    %v70 = vsub.s32 1, %v69
    %v71 = vrot.slane %v62, %v70
    %v74 = vld [vmem:[#allocation5] sm:$0x3]
    %v76 = vlaneseq
    %v77 = vshrl.u32 %v76, 7
    %v78 = vsub.s32 0, %v77
    %v79 = vrot.slane %v74, %v78
    %v80 = vlaneseq
    %v81 = vshrl.u32 %v80, 7
    %v82 = vsub.s32 1, %v81
    %v83 = vrot.slane %v74, %v82
    %v86 = vld [vmem:[%s3] sm:$0xf]
    %v89 = vunpack.c.l.s4 1983009808
    %v90 = vunpack.c.0.s8 %v89
    %v91 = vlaneseq
    %v92 = vshrl.u32 %v91, 7
    %v93 = vsub.s32 %v90, %v92
    %v94 = vrot.slane %v86, %v93
    %v95 = vcombine.high %v94, %v94
    %98 = vrot.lane.b32.xlu0 %v94, 127
    %v99 = vpop.permute.xlu0 %98
    %100 = vrot.lane.b32.xlu0 %v95, 127
    %v101 = vpop.permute.xlu0 %100
    %v102 = vlaneseq
    %v103 = vand.u32 %v102, 127
    %vm104 = vcmp.lt.s32.totalorder %v103, 127
    %v105 = vsel %vm104, %v99, %v101
    %v106 = vsel %vm104, %v101, %v99
    %107 = vrot.lane.b32.xlu0 %v94, 1
    %v108 = vpop.permute.xlu0 %107
    %109 = vrot.lane.b32.xlu0 %v95, 1
    %v110 = vpop.permute.xlu0 %109
    %vm111 = vcmp.lt.s32.totalorder %v103, 1
    %v112 = vsel %vm111, %v108, %v110
    %v113 = vsel %vm111, %v110, %v108
    %v114 = vcombine.low %v57, %v61
    %v116 = vunpack.c.l.s4 1983009808
    %v117 = vunpack.c.0.s8 %v116
    %v118 = vlaneseq
    %v119 = vshrl.u32 %v118, 7
    %v120 = vsub.s32 %v117, %v119
    %v121 = vrot.slane %v114, %v120
    %v123 = vmul.f32 %v86, %v121
    %v124 = vmul.f32 %v105, %v67
    %v125 = vmul.f32 %v106, %v71
    %v128 = vcombine.low %v124, %v125
    %v130 = vunpack.c.l.s4 1983009808
    %v131 = vunpack.c.0.s8 %v130
    %v132 = vlaneseq
    %v133 = vshrl.u32 %v132, 7
    %v134 = vsub.s32 %v131, %v133
    %v135 = vrot.slane %v128, %v134
    %v137 = vadd.f32 %v123, %v135
    %v138 = vmul.f32 %v113, %v79
    %v139 = vmul.f32 %v112, %v83
    %v142 = vcombine.low %v138, %v139
    %v144 = vunpack.c.l.s4 1983009808
    %v145 = vunpack.c.0.s8 %v144
    %v146 = vlaneseq
    %v147 = vshrl.u32 %v146, 7
    %v148 = vsub.s32 %v145, %v147
    %v149 = vrot.slane %v142, %v148
    %v151 = vadd.f32 %v137, %v149
    %152 = vst [vmem:[#allocation7] sm:$0xf] %v151
    %v153 = vld [vmem:[%s4] sm:$0xf]
    %v156 = vunpack.c.l.s4 1983009808
    %v157 = vunpack.c.0.s8 %v156
    %v158 = vlaneseq
    %v159 = vshrl.u32 %v158, 7
    %v160 = vsub.s32 %v157, %v159
    %v161 = vrot.slane %v153, %v160
    %v162 = vcombine.high %v161, %v161
    %165 = vrot.lane.b32.xlu0 %v161, 127
    %v166 = vpop.permute.xlu0 %165
    %167 = vrot.lane.b32.xlu0 %v162, 127
    %v168 = vpop.permute.xlu0 %167
    %v169 = vsel %vm104, %v166, %v168
    %v170 = vsel %vm104, %v168, %v166
    %171 = vrot.lane.b32.xlu0 %v161, 1
    %v172 = vpop.permute.xlu0 %171
    %173 = vrot.lane.b32.xlu0 %v162, 1
    %v174 = vpop.permute.xlu0 %173
    %v175 = vsel %vm111, %v172, %v174
    %v176 = vsel %vm111, %v174, %v172
    %v177 = vmul.f32 %v153, %v121
    %v178 = vmul.f32 %v169, %v67
    %v179 = vmul.f32 %v170, %v71
    %v182 = vcombine.low %v178, %v179
    %v184 = vunpack.c.l.s4 1983009808
    %v185 = vunpack.c.0.s8 %v184
    %v186 = vlaneseq
    %v187 = vshrl.u32 %v186, 7
    %v188 = vsub.s32 %v185, %v187
    %v189 = vrot.slane %v182, %v188
    %v191 = vadd.f32 %v177, %v189
    %v192 = vmul.f32 %v176, %v79
    %v193 = vmul.f32 %v175, %v83
    %v196 = vcombine.low %v192, %v193
    %v198 = vunpack.c.l.s4 1983009808
    %v199 = vunpack.c.0.s8 %v198
    %v200 = vlaneseq
    %v201 = vshrl.u32 %v200, 7
    %v202 = vsub.s32 %v199, %v201
    %v203 = vrot.slane %v196, %v202
    %v205 = vadd.f32 %v191, %v203
    %206 = vst [vmem:[#allocation8] sm:$0xf] %v205
    %v207 = vld [vmem:[%s5] sm:$0xf]
    %v210 = vunpack.c.l.s4 1983009808
    %v211 = vunpack.c.0.s8 %v210
    %v212 = vlaneseq
    %v213 = vshrl.u32 %v212, 7
    %v214 = vsub.s32 %v211, %v213
    %v215 = vrot.slane %v207, %v214
    %v216 = vcombine.high %v215, %v215
    %219 = vrot.lane.b32.xlu0 %v215, 127
    %v220 = vpop.permute.xlu0 %219
    %221 = vrot.lane.b32.xlu0 %v216, 127
    %v222 = vpop.permute.xlu0 %221
    %v223 = vsel %vm104, %v220, %v222
    %v224 = vsel %vm104, %v222, %v220
    %225 = vrot.lane.b32.xlu0 %v215, 1
    %v226 = vpop.permute.xlu0 %225
    %227 = vrot.lane.b32.xlu0 %v216, 1
    %v228 = vpop.permute.xlu0 %227
    %v229 = vsel %vm111, %v226, %v228
    %v230 = vsel %vm111, %v228, %v226
    %v231 = vmul.f32 %v207, %v121
    %v232 = vmul.f32 %v223, %v67
    %v233 = vmul.f32 %v224, %v71
    %v236 = vcombine.low %v232, %v233
    %v238 = vunpack.c.l.s4 1983009808
    %v239 = vunpack.c.0.s8 %v238
    %v240 = vlaneseq
    %v241 = vshrl.u32 %v240, 7
    %v242 = vsub.s32 %v239, %v241
    %v243 = vrot.slane %v236, %v242
    %v245 = vadd.f32 %v231, %v243
    %v246 = vmul.f32 %v230, %v79
    %v247 = vmul.f32 %v229, %v83
    %v250 = vcombine.low %v246, %v247
    %v252 = vunpack.c.l.s4 1983009808
    %v253 = vunpack.c.0.s8 %v252
    %v254 = vlaneseq
    %v255 = vshrl.u32 %v254, 7
    %v256 = vsub.s32 %v253, %v255
    %v257 = vrot.slane %v250, %v256
    %v259 = vadd.f32 %v245, %v257
    %260 = vst [vmem:[#allocation10] sm:$0xf] %v259
    // Predicated region
    $region34: #{tpu_custom_call.1} parent=1 // pred_check
      _
    $region35: #{tpu_custom_call.1} parent=1 // pred_check_branch
      %262 = sbr.rel (0) target = $region37
    $region36: #{tpu_custom_call.1} parent=1 // pred_region
      %s264 = ssub.s32 64, 64
      %265 = vsyncadd [#allocation4], %s264
      %s267 = sshll.u32 [#allocation7], 4
      %s268 = int_to_ptr.vmem [resolvable:$true] %s267
      %270 = dma.vmem_to_hbm [thread:$0]  %s268, 64, %s6, [#allocation4]
    $region37: #{tpu_custom_call.1} parent=1 // pred_fallthru
      _
    // Predicated region
    $region38: #{tpu_custom_call.1} parent=1 // pred_check
      _
    $region39: #{tpu_custom_call.1} parent=1 // pred_check_branch
      %272 = sbr.rel (0) target = $region41
    $region40: #{tpu_custom_call.1} parent=1 // pred_region
      %s274 = ssub.s32 64, 64
      %275 = vsyncadd [#allocation9], %s274
      %s277 = sshll.u32 [#allocation8], 4
      %s278 = int_to_ptr.vmem [resolvable:$true] %s277
      %280 = dma.vmem_to_hbm [thread:$0]  %s278, 64, %s7, [#allocation9]
    $region41: #{tpu_custom_call.1} parent=1 // pred_fallthru
      _
    // Predicated region
    $region42: #{tpu_custom_call.1} parent=1 // pred_check
      _
    $region43: #{tpu_custom_call.1} parent=1 // pred_check_branch
      %282 = sbr.rel (0) target = $region45
    $region44: #{tpu_custom_call.1} parent=1 // pred_region
      %s284 = ssub.s32 64, 64
      %285 = vsyncadd [#allocation9], %s284
      %s287 = sshll.u32 [#allocation10], 4
      %s288 = int_to_ptr.vmem [resolvable:$true] %s287
      %290 = dma.vmem_to_hbm [thread:$0]  %s288, 64, %s8, [#allocation9]
    $region45: #{tpu_custom_call.1} parent=1 // pred_fallthru
      _
    // Predicated region
    $region46: #{tpu_custom_call.1} parent=1 // pred_check
      _
    $region47: #{tpu_custom_call.1} parent=1 // pred_check_branch
      %292 = sbr.rel (0) target = $region49
    $region48: #{tpu_custom_call.1} parent=1 // pred_region
      %293 = dma.done [#allocation4], 64
    $region49: #{tpu_custom_call.1} parent=1 // pred_fallthru
      _
    // Predicated region
    $region50: #{tpu_custom_call.1} parent=1 // pred_check
      _
    $region51: #{tpu_custom_call.1} parent=1 // pred_check_branch
      %295 = sbr.rel (0) target = $region53
    $region52: #{tpu_custom_call.1} parent=1 // pred_region
      %296 = dma.done [#allocation9], 64
    $region53: #{tpu_custom_call.1} parent=1 // pred_fallthru
      _
    // Predicated region
    $region54: #{tpu_custom_call.1} parent=1 // pred_check
      _
    $region55: #{tpu_custom_call.1} parent=1 // pred_check_branch
      %298 = sbr.rel (0) target = $region57
    $region56: #{tpu_custom_call.1} parent=1 // pred_region
      %299 = dma.done [#allocation9], 64
    $region57: #{tpu_custom_call.1} parent=1 // pred_fallthru
      _
    %300 = vsyncpa [#allocation3], 1
    %301 = vsyncpa [#allocation6], 1
    %302 = vsyncpa [#allocation4], 1
    %303 = vsyncpa [#allocation9], 1

</llo_original>
